<compile_context>
chip_gen: v5e
topology: v5e:2x2
jax: 0.10.0
libtpu: 0.0.40
codegen_flags: <defaults>
</compile_context>

<pallas_src>
import jax
import jax.numpy as jnp
from jax.experimental import pallas as pl
from jax.experimental.pallas import tpu as pltpu


_MAX_BLOCK_ROWS = 1024


def _sublane_pack(dtype) -> int:
    # sub-32-bit dtypes pack along sublanes: f32 -> 8, bf16 -> 16, int8/fp8 -> 32
    return max(8, 32 // jnp.dtype(dtype).itemsize)


def _vmem_capacity_bytes() -> int:
    try:
        return int(pltpu.get_tpu_info().vmem_capacity_bytes)
    except Exception:
        # Conservative fallback = v7x per-TensorCore VMEM; safe on v5e/v6e too.
        return 64 * 1024 * 1024


def _choose_block_rows(n, c, x_dtype, y_dtype):
    """Pick the largest batch tile whose double-buffered x+y tiles fit ~half of VMEM."""
    pack = max(_sublane_pack(x_dtype), _sublane_pack(y_dtype))
    itemsz = jnp.dtype(x_dtype).itemsize + jnp.dtype(y_dtype).itemsize
    vmem_cap = _vmem_capacity_bytes()
    budget = vmem_cap // 2                      # inputs (incl. 2x double-buffer) <= half VMEM
    per_row = 2 * c * itemsz                    # one row of x + y, double-buffered
    br = budget // max(per_row, 1)
    br = max(pack, min(_MAX_BLOCK_ROWS, br))
    br = (br // pack) * pack
    # Don't make the tile (much) larger than the batch itself.
    n_pack = ((n + pack - 1) // pack) * pack
    br = min(br, n_pack)
    return br, pack, vmem_cap


def _soft_xent_rows_kernel(x_ref, y_ref, out_ref):
    """Per-row soft cross-entropy loss for one (block_rows, C) tile."""
    x = x_ref[...].astype(jnp.float32)           # (TB, C)
    y = y_ref[...].astype(jnp.float32)           # (TB, C)

    # numerically-stable logsumexp along the class (lane) axis
    m = jnp.max(x, axis=-1, keepdims=True)
    lse = m + jnp.log(jnp.sum(jnp.exp(x - m), axis=-1, keepdims=True))

    # sum(-y * log_softmax(x)) == sum(y * (lse - x)); no log_probs materialization.
    # Output stays (TB, 1): it is C-times smaller than the streamed inputs, so the
    # narrow writeback is negligible and we avoid an in-kernel sublane->lane transpose.
    out_ref[...] = jnp.sum(y * (lse - x), axis=-1, keepdims=True)


def soft_target_cross_entropy(x, y, reduction="mean", block_rows=None):
    """Pallas implementation of SoftTargetCrossEntropy.forward.

    x: (N, C) logits, y: (N, C) soft targets (f32 or bf16).
    Returns scalar (reduction='mean') or (N,) f32 losses (reduction='none').
    """
    assert x.shape == y.shape and x.ndim == 2
    if reduction not in ("mean", "none"):
        raise NotImplementedError
    N, C = x.shape

    auto_br, pack, vmem_cap = _choose_block_rows(N, C, x.dtype, y.dtype)
    if block_rows is None:
        block_rows = auto_br
    else:
        assert block_rows % pack == 0, f"block_rows must be a multiple of {pack}"

    # Pad batch to a multiple of block_rows; zero targets => zero loss on pad rows.
    n_pad = ((N + block_rows - 1) // block_rows) * block_rows
    if n_pad != N:
        x = jnp.pad(x, ((0, n_pad - N), (0, 0)))
        y = jnp.pad(y, ((0, n_pad - N), (0, 0)))
    grid = (n_pad // block_rows,)

    # Scoped-VMEM budget: 2 inputs x 2 double-buffers x tile, plus output + slack.
    itemsz = jnp.dtype(x.dtype).itemsize + jnp.dtype(y.dtype).itemsize
    needed = 2 * block_rows * C * itemsz + 2 * block_rows * 4 + (2 << 20)
    vmem_limit = int(min(vmem_cap * 3 // 4, max(needed, 32 << 20)))

    # TODO(synk): for very large C (>~16K classes) tile the class axis with an
    # online/two-pass logsumexp instead of shrinking block_rows.
    out = pl.pallas_call(
        _soft_xent_rows_kernel,
        out_shape=jax.ShapeDtypeStruct((n_pad, 1), jnp.float32),
        grid_spec=pltpu.PrefetchScalarGridSpec(
            num_scalar_prefetch=0,
            grid=grid,
            in_specs=[
                pl.BlockSpec((block_rows, C), lambda i: (i, 0)),
                pl.BlockSpec((block_rows, C), lambda i: (i, 0)),
            ],
            out_specs=pl.BlockSpec((block_rows, 1), lambda i: (i, 0)),
        ),
        compiler_params=pltpu.CompilerParams(
            dimension_semantics=("parallel",),
            vmem_limit_bytes=vmem_limit,
        ),
    )(x, y)

    losses = out[:N, 0]
    if reduction == "mean":
        return jnp.sum(losses) / jnp.float32(N)
    return losses


def _reference(x, y, reduction="mean"):
    loss = jnp.sum(-y * jax.nn.log_softmax(x, axis=-1), axis=-1)
    return jnp.mean(loss) if reduction == "mean" else loss


if __name__ == "__main__":
    key = jax.random.PRNGKey(0)
    kx, ky = jax.random.split(key)

    N, C = 8, 32
    x = jax.random.normal(kx, (N, C), dtype=jnp.float32)
    # soft targets: rows of a probability simplex
    y = jax.nn.softmax(jax.random.normal(ky, (N, C), dtype=jnp.float32), axis=-1)

    loss_mean = jax.block_until_ready(soft_target_cross_entropy(x, y, "mean"))
    loss_none = jax.block_until_ready(soft_target_cross_entropy(x, y, "none"))

    ref_mean = _reference(x, y, "mean")
    ref_none = _reference(x, y, "none")

    assert jnp.allclose(loss_mean, ref_mean, atol=1e-5, rtol=1e-5)
    assert jnp.allclose(loss_none, ref_none, atol=1e-5, rtol=1e-5)

    # bf16 inputs: half the HBM bytes streamed; f32 math inside the kernel.
    # (also exercises the batch-padding path: pack=16 > N=8)
    xb = x.astype(jnp.bfloat16)
    yb = y.astype(jnp.bfloat16)
    loss_bf16 = jax.block_until_ready(soft_target_cross_entropy(xb, yb, "mean"))
    ref_bf16 = _reference(xb.astype(jnp.float32), yb.astype(jnp.float32), "mean")
    assert jnp.allclose(loss_bf16, ref_bf16, atol=1e-2, rtol=1e-2)

    print("KERNEL_OK")
</pallas_src>

<mosaic_0001>
module attributes {stable_mosaic.version = 11 : i64} {
  func.func @_soft_xent_rows_kernel(%arg0: i32, %arg1: memref<8x32xf32, #tpu.memory_space<vmem>>, %arg2: memref<8x32xf32, #tpu.memory_space<vmem>>, %arg3: memref<8x1xf32, #tpu.memory_space<vmem>>) attributes {dimension_semantics = [#tpu.dimension_semantics<parallel>], iteration_bounds = array<i64: 1>, scalar_prefetch = 0 : i64, scratch_operands = 0 : i64, tpu.core_type = #tpu.core_type<tc>, window_params = [{transform_indices = @transform_0, window_bounds = array<i64: 8, 32>}, {transform_indices = @transform_1, window_bounds = array<i64: 8, 32>}, {transform_indices = @transform_2, window_bounds = array<i64: 8, 1>}]} {
    %c0 = arith.constant 0 : index
    %c0_0 = arith.constant 0 : index
    %0 = vector.load %arg1[%c0, %c0_0] : memref<8x32xf32, #tpu.memory_space<vmem>>, vector<8x32xf32>
    %c0_1 = arith.constant 0 : index
    %c0_2 = arith.constant 0 : index
    %1 = vector.load %arg2[%c0_1, %c0_2] : memref<8x32xf32, #tpu.memory_space<vmem>>, vector<8x32xf32>
    %cst = arith.constant dense<0xFF800000> : vector<8xf32>
    %2 = vector.multi_reduction <maximumf>, %0, %cst [1] : vector<8x32xf32> to vector<8xf32>
    %3 = vector.shape_cast %2 : vector<8xf32> to vector<8x1xf32>
    %4 = vector.broadcast %3 : vector<8x1xf32> to vector<8x32xf32>
    %5 = arith.subf %0, %4 : vector<8x32xf32>
    %6 = math.exp %5 : vector<8x32xf32>
    %cst_3 = arith.constant dense<0.000000e+00> : vector<8xf32>
    %7 = vector.multi_reduction <add>, %6, %cst_3 [1] : vector<8x32xf32> to vector<8xf32>
    %8 = vector.shape_cast %7 : vector<8xf32> to vector<8x1xf32>
    %9 = math.log %8 : vector<8x1xf32>
    %10 = arith.addf %3, %9 : vector<8x1xf32>
    %11 = vector.broadcast %10 : vector<8x1xf32> to vector<8x32xf32>
    %12 = arith.subf %11, %0 : vector<8x32xf32>
    %13 = arith.mulf %1, %12 : vector<8x32xf32>
    %cst_4 = arith.constant dense<0.000000e+00> : vector<8xf32>
    %14 = vector.multi_reduction <add>, %13, %cst_4 [1] : vector<8x32xf32> to vector<8xf32>
    %15 = vector.shape_cast %14 : vector<8xf32> to vector<8x1xf32>
    %c0_5 = arith.constant 0 : index
    %c0_6 = arith.constant 0 : index
    %16 = vector.load %arg3[%c0_5, %c0_6] : memref<8x1xf32, #tpu.memory_space<vmem>>, vector<8x1xf32>
    tpu.vector_store %arg3[%c0_5, %c0_6], %15 {strides = array<i32>} : memref<8x1xf32, #tpu.memory_space<vmem>>, vector<8x1xf32>,
    return
  }
  func.func @transform_0(%arg0: i32) -> (i32, i32) {
    %c0_i32 = arith.constant 0 : i32
    %c0_i32_0 = arith.constant 0 : i32
    return %arg0, %c0_i32 : i32, i32
  }
  func.func @transform_1(%arg0: i32) -> (i32, i32) {
    %c0_i32 = arith.constant 0 : i32
    %c0_i32_0 = arith.constant 0 : i32
    return %arg0, %c0_i32 : i32, i32
  }
  func.func @transform_2(%arg0: i32) -> (i32, i32) {
    %c0_i32 = arith.constant 0 : i32
    %c0_i32_0 = arith.constant 0 : i32
    return %arg0, %c0_i32 : i32, i32
  }
}

</mosaic_0001>

<llo_original>
// kernel: tpu_custom_call.1
$region0: #{tpu_custom_call.1}
  #allocation0 [shape = 'u32[]', space=smem, size = 0x4, offset = 0x4, fixed_abs, tag = 'smem constant byte address 0x4 - core index']
  #allocation1 [shape = 'u32[72,128]{1,0:T(1,128)}', space=vmem, size = 0x9000, scoped, tag = 'internal scratch']
  %s0 = inlined_call_operand.hbm [shape: f32[8,32], index: 0, kind: input, shape index: {}]
  %s1 = inlined_call_operand.hbm [shape: f32[8,32], index: 1, kind: input, shape index: {}]
  %s2 = inlined_call_operand.vmem [shape: f32[8,1], index: 2, kind: output, shape index: {}]
  %s3 = sld [smem:[#allocation0]]
  $region26: #{tpu_custom_call.1} parent=0
    _
  %s5 = ssub.s32 1, %s3
  %s6 = scalar_select 0, %s5, %s3
  $region1: #{tpu_custom_call.1} parent=0
    #allocation2 [shape = 'u8[4096]{0}', space=vmem, size = 0x1000, scoped, tag = 'input window, operand 0, single buffered']
    #allocation3 [shape = 's32[1]{0}', space=sflag, size = 0x4, scoped, tag = 'scoped memory for tpu_custom_call.1']
    #allocation4 [shape = 'u8[4096]{0}', space=vmem, size = 0x1000, scoped, tag = 'input window, operand 1, single buffered']
    #allocation5 [shape = 's32[1]{0}', space=sflag, size = 0x4, scoped, tag = 'scoped memory for tpu_custom_call.1']
    %7 = vsyncpa [#allocation3], 0
    %8 = vsyncpa [#allocation5], 0
    // Predicated region
    $region2: #{tpu_custom_call.1} parent=1 // pred_check
      _
    $region3: #{tpu_custom_call.1} parent=1 // pred_check_branch
      %10 = sbr.rel (0) target = $region5
    $region4: #{tpu_custom_call.1} parent=1 // pred_region
      %12 = vsyncadd [#allocation3], 0
      %s14 = sshll.u32 %s0, 4
      %s15 = int_to_ptr.hbm [resolvable:$true] %s14
      %s16 = sshll.u32 [#allocation2], 4
      %s17 = int_to_ptr.vmem [resolvable:$true] %s16
      %19 = dma.hbm_to_vmem [thread:$0]  %s15, 128, %s17, [#allocation3]
    $region5: #{tpu_custom_call.1} parent=1 // pred_fallthru
      _
    // Predicated region
    $region6: #{tpu_custom_call.1} parent=1 // pred_check
      _
    $region7: #{tpu_custom_call.1} parent=1 // pred_check_branch
      %21 = sbr.rel (0) target = $region9
    $region8: #{tpu_custom_call.1} parent=1 // pred_region
      %23 = vsyncadd [#allocation5], 0
      %s25 = sshll.u32 %s1, 4
      %s26 = int_to_ptr.hbm [resolvable:$true] %s25
      %s27 = sshll.u32 [#allocation4], 4
      %s28 = int_to_ptr.vmem [resolvable:$true] %s27
      %30 = dma.hbm_to_vmem [thread:$0]  %s26, 128, %s28, [#allocation5]
    $region9: #{tpu_custom_call.1} parent=1 // pred_fallthru
      _
    // Predicated region
    $region10: #{tpu_custom_call.1} parent=1 // pred_check
      _
    $region11: #{tpu_custom_call.1} parent=1 // pred_check_branch
      %32 = sbr.rel (0) target = $region13
    $region12: #{tpu_custom_call.1} parent=1 // pred_region
      %34 = dma.done [#allocation3], 128
    $region13: #{tpu_custom_call.1} parent=1 // pred_fallthru
      _
    // Predicated region
    $region14: #{tpu_custom_call.1} parent=1 // pred_check
      _
    $region15: #{tpu_custom_call.1} parent=1 // pred_check_branch
      %36 = sbr.rel (0) target = $region17
    $region16: #{tpu_custom_call.1} parent=1 // pred_region
      %38 = dma.done [#allocation5], 128
    $region17: #{tpu_custom_call.1} parent=1 // pred_fallthru
      _
    %v39 = vld [vmem:[#allocation2] sm:$0xff]
    %v40 = vld [vmem:[#allocation4] sm:$0xff]
    %vm41 = vcmask 261120
    %v42 = vsel %vm41, %v39, -inf
    %43 = vmax.xlane.f32.xlu0 %v42
    %v44 = vpop.xlane.xlu0 %43
    %v45 = vsub.f32 %v39, %v44
    %v46 = vmul.f32 %v45, 1.442695
    %v47 = vpow.pop %v46
    %v48 = vsel %vm41, %v47, 0.0
    %49 = vadd.xlane.f32.xlu0 %v48
    %v50 = vpop.xlane.xlu0 %49
    %v51 = vlog2.pop %v50
    %v52 = vmul.f32 %v51, 0.6931472
    %v53 = vadd.f32 %v44, %v52
    %v54 = vsub.f32 %v53, %v39
    %v55 = vmul.f32 %v40, %v54
    %v56 = vsel %vm41, %v55, 0.0
    %57 = vadd.xlane.f32.xlu0 %v56
    %v58 = vpop.xlane.xlu0 %57
    %vm59 = vcmask 7168
    %60 = vst.msk [vmem:[%s2] sm:$0xff] %vm59, %v58
    // Predicated region
    $region18: #{tpu_custom_call.1} parent=1 // pred_check
      _
    $region19: #{tpu_custom_call.1} parent=1 // pred_check_branch
      %62 = sbr.rel (0) target = $region21
    $region20: #{tpu_custom_call.1} parent=1 // pred_region
      _
    $region21: #{tpu_custom_call.1} parent=1 // pred_fallthru
      _
    // Predicated region
    $region22: #{tpu_custom_call.1} parent=1 // pred_check
      _
    $region23: #{tpu_custom_call.1} parent=1 // pred_check_branch
      %64 = sbr.rel (0) target = $region25
    $region24: #{tpu_custom_call.1} parent=1 // pred_region
      _
    $region25: #{tpu_custom_call.1} parent=1 // pred_fallthru
      _
    %65 = vsyncpa [#allocation3], 1
    %66 = vsyncpa [#allocation5], 1

</llo_original>
